<compile_context>
chip_gen: v5e
topology: v5e:2x2
jax: 0.10.0
libtpu: 0.0.40
codegen_flags: <defaults>
</compile_context>

<pallas_src>
import jax
import jax.numpy as jnp
import numpy as np
from jax.experimental import pallas as pl
from jax.experimental.pallas import tpu as pltpu


# ---------------------------------------------------------------------------
# Pallas kernel 1: pixel normalization  out = img * inv_std + bias
# ---------------------------------------------------------------------------
def _normalize_kernel(img_ref, scale_ref, bias_ref, out_ref):
    # img block: (rt, lt); scale/bias: (rt, 1) broadcast over lanes (VPU only).
    out_ref[...] = img_ref[...] * scale_ref[...] + bias_ref[...]


def normalize_images(images_nchw, pixel_mean, pixel_std,
                     lane_tile=2048, row_tile=256):
    """images_nchw: (N, C, H, W) -> normalized float32, same shape."""
    n, c, h, w = images_nchw.shape
    hw = h * w
    r = n * c
    img = images_nchw.reshape(r, hw).astype(jnp.float32)

    # Hoist the reciprocal out of the kernel: 3 scalars instead of N*C*H*W divides.
    inv_std = (1.0 / pixel_std.astype(jnp.float32))
    scale = jnp.tile(inv_std, n).reshape(r, 1)                       # (N*C, 1)
    bias = jnp.tile(-pixel_mean.astype(jnp.float32) * inv_std, n).reshape(r, 1)

    # Lane tile: either the full row (always legal) or a multiple of 128.
    # Row tile: either the full extent (always legal) or a multiple of 8.
    lt = hw if hw <= lane_tile else lane_tile      # lane_tile is a mult of 128
    rt = r if r <= row_tile else row_tile          # row_tile is a mult of 8
    grid = (pl.cdiv(r, rt), pl.cdiv(hw, lt))

    out = pl.pallas_call(
        _normalize_kernel,
        out_shape=jax.ShapeDtypeStruct((r, hw), jnp.float32),
        grid=grid,
        in_specs=[
            pl.BlockSpec((rt, lt), lambda i, j: (i, j)),
            pl.BlockSpec((rt, 1), lambda i, j: (i, 0)),
            pl.BlockSpec((rt, 1), lambda i, j: (i, 0)),
        ],
        out_specs=pl.BlockSpec((rt, lt), lambda i, j: (i, j)),
        compiler_params=pltpu.CompilerParams(
            dimension_semantics=("parallel", "parallel")),
    )(img, scale, bias)
    return out.reshape(n, c, h, w)


# ---------------------------------------------------------------------------
# Pallas kernel 2: semantic_inference
#   semseg = einsum('qc,qfhw->cfhw', softmax(mask_cls)[..., :-1], sigmoid(mask_pred))
#   = probs_kq (K,Q)  @  sigmoid(mask_flat) (Q, S)   with S = F*H*W
# ---------------------------------------------------------------------------
def _semantic_inference_kernel(probs_ref, mask_ref, out_ref):
    # probs_ref: (K, Q) pre-softmaxed + pre-transposed class weights (hoisted,
    #            resident in VMEM across all lane tiles).
    # mask_ref:  (Q, TILE) mask logits; sigmoid fused before the MXU matmul.
    mp = jax.nn.sigmoid(mask_ref[...].astype(jnp.float32))
    out_ref[...] = jnp.dot(probs_ref[...], mp,
                           preferred_element_type=jnp.float32)


def semantic_inference(mask_cls, mask_pred, tile=2048):
    """mask_cls: (Q, K+1), mask_pred: (Q, F, H, W) -> (K, F, H, W)."""
    q, k1 = mask_cls.shape
    k = k1 - 1
    _, f, h, w = mask_pred.shape
    s = f * h * w

    # Softmax / slice / transpose hoisted out of the kernel: tiny (Q, K+1) op
    # done once instead of once per lane tile, and gives the MXU its natural
    # [K,Q] x [Q,TILE] shape (no in-kernel XLU transpose).
    probs_kq = jax.nn.softmax(mask_cls.astype(jnp.float32), axis=-1)[:, :-1].T  # (K, Q)

    # Reshape is free (contiguous); no astype / pad HBM passes.
    mp = mask_pred.reshape(q, s)

    lt = s if s <= tile else tile                  # full row or multiple of 128
    grid = (pl.cdiv(s, lt),)

    out = pl.pallas_call(
        _semantic_inference_kernel,
        out_shape=jax.ShapeDtypeStruct((k, s), jnp.float32),
        grid=grid,
        in_specs=[
            pl.BlockSpec((k, q), lambda i: (0, 0)),     # resident class weights
            pl.BlockSpec((q, lt), lambda i: (0, i)),    # streamed mask tile
        ],
        out_specs=pl.BlockSpec((k, lt), lambda i: (0, i)),
        compiler_params=pltpu.CompilerParams(
            dimension_semantics=("parallel",)),
    )(probs_kq, mp)
    return out.reshape(k, f, h, w)


# ---------------------------------------------------------------------------
# JAX glue: bilinear interpolation matching F.interpolate(align_corners=False)
# ---------------------------------------------------------------------------
def bilinear_resize(x, out_h, out_w):
    in_h, in_w = x.shape[-2], x.shape[-1]

    def src_idx(out_size, in_size):
        scale = in_size / out_size
        coord = (jnp.arange(out_size, dtype=jnp.float32) + 0.5) * scale - 0.5
        coord = jnp.maximum(coord, 0.0)
        i0 = jnp.minimum(jnp.floor(coord).astype(jnp.int32), in_size - 1)
        i1 = jnp.minimum(i0 + 1, in_size - 1)
        frac = coord - i0.astype(jnp.float32)
        return i0, i1, frac

    y0, y1, fy = src_idx(out_h, in_h)
    x0, x1, fx = src_idx(out_w, in_w)
    top = x[..., y0, :]
    bot = x[..., y1, :]
    rows = top * (1.0 - fy)[:, None] + bot * fy[:, None]
    left = rows[..., :, x0]
    right = rows[..., :, x1]
    return left * (1.0 - fx) + right * fx


def sem_seg_postprocess(result, img_size, output_height, output_width):
    result = result[..., : img_size[0], : img_size[1]]
    return bilinear_resize(result, output_height, output_width)


# ---------------------------------------------------------------------------
# VideoMaskFormer (inference path; ml_head / ml_use_gt disabled, semantic_on)
# ---------------------------------------------------------------------------
class VideoMaskFormerPallas:
    def __init__(self, *, num_queries, num_classes, num_frames,
                 object_mask_threshold=0.8, overlap_threshold=0.8,
                 size_divisibility=4, sem_seg_postprocess_before_inference=True,
                 pixel_mean=(123.675, 116.28, 103.53),
                 pixel_std=(58.395, 57.12, 57.375),
                 semantic_on=True, mask_feat_stride=4, seed=0):
        self.num_queries = num_queries
        self.num_classes = num_classes
        self.num_frames = num_frames
        self.object_mask_threshold = object_mask_threshold
        self.overlap_threshold = overlap_threshold
        self.size_divisibility = size_divisibility
        self.sem_seg_postprocess_before_inference = sem_seg_postprocess_before_inference
        self.pixel_mean = jnp.asarray(pixel_mean, jnp.float32)
        self.pixel_std = jnp.asarray(pixel_std, jnp.float32)
        self.semantic_on = semantic_on
        self.mask_feat_stride = mask_feat_stride
        # ml_* path (RANKSEG) is disabled (cfg.MODEL.RANKSEG.FLAG = False)
        self.ml_head = None
        self.ml_use_gt = False
        k_logit, k_mask = jax.random.split(jax.random.PRNGKey(seed + 1), 2)
        self._k_logit = k_logit
        self._k_mask = k_mask

    # TODO(synk): backbone + sem_seg_head are external detectron2 submodules
    # (ResNet/Swin + MSDeformAttn pixel decoder + transformer decoder); they
    # have no definition in this module, so they are replaced here by a
    # deterministic synthetic head producing tensors of the correct shapes.
    def _synthetic_sem_seg_head(self, images, batch_size):
        H, W = images.shape[-2], images.shape[-1]
        h, w = H // self.mask_feat_stride, W // self.mask_feat_stride
        pred_logits = jax.random.normal(
            self._k_logit,
            (batch_size, self.num_queries, self.num_classes + 1), jnp.float32)
        pred_masks = jax.random.normal(
            self._k_mask,
            (batch_size, self.num_queries, self.num_frames, h, w), jnp.float32)
        return {"pred_logits": pred_logits, "pred_masks": pred_masks}

    def inference_video(self, pred_cls, pred_masks, img_size,
                        output_height, output_width):
        scores = jax.nn.softmax(pred_cls, axis=-1)[:, :-1]          # (Q, K)
        labels = jnp.tile(jnp.arange(self.num_classes), (self.num_queries,))
        scores_flat = scores.reshape(-1)
        scores_per_image, topk_indices = jax.lax.top_k(scores_flat, 10)
        labels_per_image = labels[topk_indices]
        query_indices = topk_indices // self.num_classes
        pm = pred_masks[query_indices]
        pm = pm[:, :, : img_size[0], : img_size[1]]
        pm = bilinear_resize(pm, output_height, output_width)
        masks = pm > 0.0
        return {
            "image_size": (output_height, output_width),
            "pred_scores": [float(s) for s in np.asarray(scores_per_image)],
            "pred_labels": [int(l) for l in np.asarray(labels_per_image)],
            "pred_masks": [m for m in masks],
        }

    def forward(self, batched_inputs):
        """batched_inputs: list of dicts with 'image': (T, 3, H, W), 'height', 'width'."""
        B = len(batched_inputs)
        # stack all frames of all videos (ImageList: same-size, divisible -> no pad)
        frames = jnp.concatenate([v["image"] for v in batched_inputs], axis=0)
        images = normalize_images(frames, self.pixel_mean, self.pixel_std)

        outputs = self._synthetic_sem_seg_head(images, B)

        mask_cls_results = outputs["pred_logits"]        # (B, Q, K+1)
        mask_pred_results = outputs["pred_masks"]        # (B, Q, T, h, w)

        mask_cls_result = mask_cls_results[0]
        H, W = images.shape[-2], images.shape[-1]
        mask_pred_result = bilinear_resize(mask_pred_results[0], H, W)

        input_per_image = batched_inputs[0]
        image_size = (H, W)
        height = input_per_image.get("height", image_size[0])
        width = input_per_image.get("width", image_size[1])

        output = self.inference_video(mask_cls_result, mask_pred_result,
                                      image_size, height, width)

        if self.sem_seg_postprocess_before_inference:
            mask_pred_result = sem_seg_postprocess(
                mask_pred_result, image_size, height, width)

        if self.semantic_on:
            output["sem_seg"] = semantic_inference(mask_cls_result, mask_pred_result)
        return output, images, mask_cls_result, mask_pred_result


if __name__ == "__main__":
    B, T, Cimg, H, W = 2, 2, 3, 16, 16
    Q, K = 8, 16

    key = jax.random.PRNGKey(0)
    frames = jax.random.uniform(key, (B, T, Cimg, H, W),
                                minval=0.0, maxval=255.0, dtype=jnp.float32)
    batched_inputs = [{"image": frames[b], "height": H, "width": W}
                      for b in range(B)]

    model = VideoMaskFormerPallas(num_queries=Q, num_classes=K, num_frames=T)
    output, norm_images, mask_cls, mask_pred = model.forward(batched_inputs)
    sem_seg = jax.block_until_ready(output["sem_seg"])
    norm_images = jax.block_until_ready(norm_images)

    # --- correctness checks against pure-JAX references -------------------
    ref_norm = (frames.reshape(B * T, Cimg, H, W)
                - model.pixel_mean.reshape(1, Cimg, 1, 1)) / \
               model.pixel_std.reshape(1, Cimg, 1, 1)
    np.testing.assert_allclose(np.asarray(norm_images), np.asarray(ref_norm),
                               rtol=1e-5, atol=1e-5)

    ref_probs = jax.nn.softmax(mask_cls, axis=-1)[:, :-1]
    ref_semseg = jnp.einsum("qc,qfhw->cfhw", ref_probs,
                            jax.nn.sigmoid(mask_pred))
    np.testing.assert_allclose(np.asarray(sem_seg), np.asarray(ref_semseg),
                               rtol=1e-4, atol=1e-4)

    assert sem_seg.shape == (K, T, H, W)
    assert len(output["pred_scores"]) == 10
    print("KERNEL_OK")
</pallas_src>

<mosaic_0001>
module attributes {stable_mosaic.version = 11 : i64} {
  func.func @_normalize_kernel(%arg0: i32, %arg1: i32, %arg2: memref<12x256xf32, #tpu.memory_space<vmem>>, %arg3: memref<12x1xf32, #tpu.memory_space<vmem>>, %arg4: memref<12x1xf32, #tpu.memory_space<vmem>>, %arg5: memref<12x256xf32, #tpu.memory_space<vmem>>) attributes {dimension_semantics = [#tpu.dimension_semantics<parallel>, #tpu.dimension_semantics<parallel>], iteration_bounds = array<i64: 1, 1>, scalar_prefetch = 0 : i64, scratch_operands = 0 : i64, tpu.core_type = #tpu.core_type<tc>, window_params = [{transform_indices = @transform_0, window_bounds = array<i64: 12, 256>}, {transform_indices = @transform_1, window_bounds = array<i64: 12, 1>}, {transform_indices = @transform_2, window_bounds = array<i64: 12, 1>}, {transform_indices = @transform_3, window_bounds = array<i64: 12, 256>}]} {
    %c0 = arith.constant 0 : index
    %c0_0 = arith.constant 0 : index
    %0 = vector.load %arg2[%c0, %c0_0] : memref<12x256xf32, #tpu.memory_space<vmem>>, vector<12x256xf32>
    %c0_1 = arith.constant 0 : index
    %c0_2 = arith.constant 0 : index
    %1 = vector.load %arg3[%c0_1, %c0_2] : memref<12x1xf32, #tpu.memory_space<vmem>>, vector<12x1xf32>
    %2 = vector.broadcast %1 : vector<12x1xf32> to vector<12x256xf32>
    %3 = arith.mulf %0, %2 : vector<12x256xf32>
    %c0_3 = arith.constant 0 : index
    %c0_4 = arith.constant 0 : index
    %4 = vector.load %arg4[%c0_3, %c0_4] : memref<12x1xf32, #tpu.memory_space<vmem>>, vector<12x1xf32>
    %5 = vector.broadcast %4 : vector<12x1xf32> to vector<12x256xf32>
    %6 = arith.addf %3, %5 : vector<12x256xf32>
    %c0_5 = arith.constant 0 : index
    %c0_6 = arith.constant 0 : index
    %7 = vector.load %arg5[%c0_5, %c0_6] : memref<12x256xf32, #tpu.memory_space<vmem>>, vector<12x256xf32>
    tpu.vector_store %arg5[%c0_5, %c0_6], %6 {strides = array<i32>} : memref<12x256xf32, #tpu.memory_space<vmem>>, vector<12x256xf32>,
    return
  }
  func.func @transform_0(%arg0: i32, %arg1: i32) -> (i32, i32) {
    %c0_i32 = arith.constant 0 : i32
    return %arg0, %arg1 : i32, i32
  }
  func.func @transform_1(%arg0: i32, %arg1: i32) -> (i32, i32) {
    %c0_i32 = arith.constant 0 : i32
    %c0_i32_0 = arith.constant 0 : i32
    return %arg0, %c0_i32 : i32, i32
  }
  func.func @transform_2(%arg0: i32, %arg1: i32) -> (i32, i32) {
    %c0_i32 = arith.constant 0 : i32
    %c0_i32_0 = arith.constant 0 : i32
    return %arg0, %c0_i32 : i32, i32
  }
  func.func @transform_3(%arg0: i32, %arg1: i32) -> (i32, i32) {
    %c0_i32 = arith.constant 0 : i32
    return %arg0, %arg1 : i32, i32
  }
}

</mosaic_0001>

<llo_original>
// kernel: tpu_custom_call.1
$region0: #{tpu_custom_call.1}
  #allocation0 [shape = 'u32[]', space=smem, size = 0x4, offset = 0x4, fixed_abs, tag = 'smem constant byte address 0x4 - core index']
  #allocation1 [shape = 'u32[72,128]{1,0:T(1,128)}', space=vmem, size = 0x9000, scoped, tag = 'internal scratch']
  %s0 = inlined_call_operand.vmem [shape: f32[12,256], index: 0, kind: input, shape index: {}]
  %s1 = inlined_call_operand.vmem [shape: f32[12,1], index: 1, kind: input, shape index: {}]
  %s2 = inlined_call_operand.vmem [shape: f32[12,1], index: 2, kind: input, shape index: {}]
  %s3 = inlined_call_operand.hbm [shape: f32[12,256], index: 3, kind: output, shape index: {}]
  %s4 = sld [smem:[#allocation0]]
  $region22: #{tpu_custom_call.1} parent=0
    _
  %s6 = ssub.s32 1, %s4
  %s7 = scalar_select 0, %s6, %s4
  $region1: #{tpu_custom_call.1} parent=0
    #allocation2 [shape = 'u8[16384]{0}', space=vmem, size = 0x4000, scoped, tag = 'output window, operand 0, single buffered']
    #allocation3 [shape = 's32[1]{0}', space=sflag, size = 0x4, scoped, tag = 'scoped memory for tpu_custom_call.1']
    %8 = vsyncpa [#allocation3], 0
    // Predicated region
    $region2: #{tpu_custom_call.1} parent=1 // pred_check
      _
    $region3: #{tpu_custom_call.1} parent=1 // pred_check_branch
      %10 = sbr.rel (0) target = $region5
    $region4: #{tpu_custom_call.1} parent=1 // pred_region
      _
    $region5: #{tpu_custom_call.1} parent=1 // pred_fallthru
      _
    // Predicated region
    $region6: #{tpu_custom_call.1} parent=1 // pred_check
      _
    $region7: #{tpu_custom_call.1} parent=1 // pred_check_branch
      %12 = sbr.rel (0) target = $region9
    $region8: #{tpu_custom_call.1} parent=1 // pred_region
      _
    $region9: #{tpu_custom_call.1} parent=1 // pred_fallthru
      _
    // Predicated region
    $region10: #{tpu_custom_call.1} parent=1 // pred_check
      _
    $region11: #{tpu_custom_call.1} parent=1 // pred_check_branch
      %14 = sbr.rel (0) target = $region13
    $region12: #{tpu_custom_call.1} parent=1 // pred_region
      _
    $region13: #{tpu_custom_call.1} parent=1 // pred_fallthru
      _
    %v15 = vld [vmem:[%s0] sm:$0xff]
    %v16 = vld [vmem:[%s0 + $0x8] sm:$0xff]
    %v17 = vld [vmem:[%s0 + $0x10] sm:$0xf]
    %v18 = vld [vmem:[%s0 + $0x18] sm:$0xf]
    %v19 = vld [vmem:[%s1] sm:$0xff]
    %v20 = vld [vmem:[%s1 + $0x8] sm:$0xf]
    %22 = vset.pattern.permute.xlu0 0
    %23 = vperm.xlu0 %22, %v19
    %v24 = vpop.permute.xlu0 %23
    %27 = vset.pattern.permute.xlu0 0
    %28 = vperm.xlu0 %27, %v20
    %v29 = vpop.permute.xlu0 %28
    %v31 = vmul.f32 %v15, %v24
    %v32 = vmul.f32 %v16, %v24
    %v33 = vmul.f32 %v17, %v29
    %v34 = vmul.f32 %v18, %v29
    %v35 = vld [vmem:[%s2] sm:$0xff]
    %v36 = vld [vmem:[%s2 + $0x8] sm:$0xf]
    %38 = vset.pattern.permute.xlu0 0
    %39 = vperm.xlu0 %38, %v35
    %v40 = vpop.permute.xlu0 %39
    %43 = vset.pattern.permute.xlu0 0
    %44 = vperm.xlu0 %43, %v36
    %v45 = vpop.permute.xlu0 %44
    %v47 = vadd.f32 %v31, %v40
    %v48 = vadd.f32 %v32, %v40
    %v49 = vadd.f32 %v33, %v45
    %v50 = vadd.f32 %v34, %v45
    %51 = vst [vmem:[#allocation2] sm:$0xff] %v47
    %52 = vst [vmem:[#allocation2 + $0x8] sm:$0xff] %v48
    %53 = vst [vmem:[#allocation2 + $0x10] sm:$0xf] %v49
    %54 = vst [vmem:[#allocation2 + $0x18] sm:$0xf] %v50
    // Predicated region
    $region14: #{tpu_custom_call.1} parent=1 // pred_check
      _
    $region15: #{tpu_custom_call.1} parent=1 // pred_check_branch
      %56 = sbr.rel (0) target = $region17
    $region16: #{tpu_custom_call.1} parent=1 // pred_region
      %58 = vsyncadd [#allocation3], 0
      %s59 = sshll.u32 [#allocation2], 4
      %s60 = int_to_ptr.vmem [resolvable:$true] %s59
      %s61 = sshll.u32 %s3, 4
      %s62 = int_to_ptr.hbm [resolvable:$true] %s61
      %67 = dma.vmem_to_hbm [thread:$0]  %s60, 512, %s62, [#allocation3], 256, 256, 16
    $region17: #{tpu_custom_call.1} parent=1 // pred_fallthru
      _
    // Predicated region
    $region18: #{tpu_custom_call.1} parent=1 // pred_check
      _
    $region19: #{tpu_custom_call.1} parent=1 // pred_check_branch
      %69 = sbr.rel (0) target = $region21
    $region20: #{tpu_custom_call.1} parent=1 // pred_region
      %71 = dma.done [#allocation3], 512
    $region21: #{tpu_custom_call.1} parent=1 // pred_fallthru
      _
    %72 = vsyncpa [#allocation3], 1

</llo_original>
